<compile_context>
chip_gen: v7x
topology: tpu7x:2x2x1
jax: 0.10.0
libtpu: 0.0.40
codegen_flags: <defaults>
</compile_context>

<pallas_src>
import functools

import jax
import jax.numpy as jnp
from jax.experimental import pallas as pl
from jax.experimental.pallas import tpu as pltpu

EPS = 1e-5                 # PyTorch F.batch_norm default
LANE = 128
VMEM_BUDGET = 36 << 20     # per-step working-set target (safe under v7x's 64 MiB)
VMEM_LIMIT_CAP = 48 << 20  # never raise the scoped limit past this (v7x headroom)


def _round_up(a, b):
    return ((a + b - 1) // b) * b


def _cdiv(a, b):
    return (a + b - 1) // b


def _sublane_multiple(itemsize):
    # Packed-sublane multiple for the instance (second-to-last) block dim.
    return {4: 8, 2: 16, 1: 32}.get(itemsize, 8)


def _vmem_limit(ws_bytes):
    return int(min(VMEM_LIMIT_CAP, max(int(ws_bytes * 1.25) + (2 << 20), 16 << 20)))


# ---------------------------------------------------------------------------
# Single-pass kernel: one (tbc, HW) row-group per grid step.
# ---------------------------------------------------------------------------
def _adain_kernel(x_ref, w_ref, b_ref, o_ref, *, eps, lowp_apply):
    # x_ref/o_ref: (tbc, HW) tile; w_ref/b_ref: (tbc, 1) f32 tiles.
    xf = x_ref[...].astype(jnp.float32)
    mean = jnp.mean(xf, axis=-1, keepdims=True)          # lane reduce (XLU)
    xc = xf - mean
    var = jnp.mean(xc * xc, axis=-1, keepdims=True)      # biased variance
    scale = w_ref[...] * jax.lax.rsqrt(var + eps)        # (tbc, 1), rsqrt on EUP
    if lowp_apply:
        # bf16 normalize pass: stats in f32, apply runs packed (2 elem/lane).
        shift = b_ref[...] - mean * scale
        o_ref[...] = (x_ref[...] * scale.astype(o_ref.dtype)
                      + shift.astype(o_ref.dtype))
    else:
        # xc is already materialized for the variance; (x-mean)*scale + b is the
        # numerically safest apply (no folded-affine cancellation).
        o_ref[...] = (xc * scale + b_ref[...]).astype(o_ref.dtype)


# ---------------------------------------------------------------------------
# Large-plane fallback: two-pass HW split.
# ---------------------------------------------------------------------------
def _stats_kernel(w_ref, b_ref, x_ref, scale_ref, shift_ref, sum_sc, sq_sc,
                  *, hw, thw, eps):
    j = pl.program_id(1)

    @pl.when(j == 0)
    def _():
        sum_sc[...] = jnp.zeros_like(sum_sc)
        sq_sc[...] = jnp.zeros_like(sq_sc)

    x = x_ref[...].astype(jnp.float32)
    if hw % thw != 0:
        # Only the final HW block has out-of-bounds lanes; zero them so they do
        # not pollute the sums (fallback path only).
        lane = jax.lax.broadcasted_iota(jnp.int32, x.shape, 1)
        x = jnp.where(j * thw + lane < hw, x, 0.0)
    sum_sc[...] += jnp.sum(x, axis=-1, keepdims=True)
    sq_sc[...] += jnp.sum(x * x, axis=-1, keepdims=True)

    @pl.when(j == pl.num_programs(1) - 1)
    def _():
        inv_n = jnp.float32(1.0 / hw)
        mean = sum_sc[...] * inv_n
        # E[x^2] - mean^2 (mild cancellation risk when |mean| >> std; this form is
        # only used by the large-plane fallback).
        var = jnp.maximum(sq_sc[...] * inv_n - mean * mean, 0.0)
        scale = w_ref[...] * jax.lax.rsqrt(var + eps)
        scale_ref[...] = scale
        shift_ref[...] = b_ref[...] - mean * scale


def _apply_kernel(x_ref, scale_ref, shift_ref, o_ref, *, lowp_apply):
    scale = scale_ref[...]
    shift = shift_ref[...]
    if lowp_apply:
        o_ref[...] = (x_ref[...] * scale.astype(o_ref.dtype)
                      + shift.astype(o_ref.dtype))
    else:
        o_ref[...] = (x_ref[...].astype(jnp.float32) * scale
                      + shift).astype(o_ref.dtype)


def _adain_hw_split(x2, w2, b2, eps, sub, itemsize, budget, lowp_apply):
    BC, HW = x2.shape
    tbc = BC if BC <= sub else sub
    # thw sized so double-buffered dtype tiles + f32 temporaries fit the budget.
    per_lane_ws = tbc * (4 * itemsize + 8) + 16
    thw = (budget // per_lane_ws) // LANE * LANE
    thw = max(LANE, thw)
    if thw >= HW:
        thw = HW
    n_bc = _cdiv(BC, tbc)
    n_hw = _cdiv(HW, thw)
    vlim = _vmem_limit(tbc * thw * (4 * itemsize + 8))

    scale, shift = pl.pallas_call(
        functools.partial(_stats_kernel, hw=HW, thw=thw, eps=eps),
        out_shape=(jax.ShapeDtypeStruct((BC, 1), jnp.float32),
                   jax.ShapeDtypeStruct((BC, 1), jnp.float32)),
        grid=(n_bc, n_hw),
        in_specs=[
            pl.BlockSpec((tbc, 1), lambda i, j: (i, 0)),     # gamma
            pl.BlockSpec((tbc, 1), lambda i, j: (i, 0)),     # beta
            pl.BlockSpec((tbc, thw), lambda i, j: (i, j)),   # x chunk
        ],
        out_specs=(
            pl.BlockSpec((tbc, 1), lambda i, j: (i, 0)),     # scale (resident over j)
            pl.BlockSpec((tbc, 1), lambda i, j: (i, 0)),     # shift (resident over j)
        ),
        scratch_shapes=[pltpu.VMEM((tbc, 1), jnp.float32),
                        pltpu.VMEM((tbc, 1), jnp.float32)],
        compiler_params=pltpu.CompilerParams(
            dimension_semantics=("parallel", "arbitrary"),
            vmem_limit_bytes=vlim,
        ),
    )(w2, b2, x2)

    out2 = pl.pallas_call(
        functools.partial(_apply_kernel, lowp_apply=lowp_apply),
        out_shape=jax.ShapeDtypeStruct((BC, HW), x2.dtype),
        grid=(n_bc, n_hw),
        in_specs=[
            pl.BlockSpec((tbc, thw), lambda i, j: (i, j)),
            pl.BlockSpec((tbc, 1), lambda i, j: (i, 0)),
            pl.BlockSpec((tbc, 1), lambda i, j: (i, 0)),
        ],
        out_specs=pl.BlockSpec((tbc, thw), lambda i, j: (i, j)),
        compiler_params=pltpu.CompilerParams(
            dimension_semantics=("parallel", "parallel"),
            vmem_limit_bytes=vlim,
        ),
    )(x2, scale, shift)
    return out2


# ---------------------------------------------------------------------------
# Wrapper
# ---------------------------------------------------------------------------
def adaptive_instance_norm_2d(x, weight, bias, eps=EPS, *,
                              block_rows=None,
                              vmem_budget_bytes=VMEM_BUDGET):
    """x: (B, C, H, W); weight, bias: (B*C,) per-(b,c) affine (any float dtype).

    block_rows (optional) forces the instance rows per grid step in the single-pass
    path (must be a multiple of the packed sublane count, or >= B*C).
    vmem_budget_bytes bounds the per-step VMEM working set used for tile sizing.
    """
    B, C, H, W = x.shape
    BC, HW = B * C, H * W

    x2 = x.reshape(BC, HW)                        # free view: lane-dense layout
    w2 = weight.reshape(BC, 1).astype(jnp.float32)
    b2 = bias.reshape(BC, 1).astype(jnp.float32)

    itemsize = jnp.dtype(x.dtype).itemsize
    sub = _sublane_multiple(itemsize)
    lowp_apply = x.dtype == jnp.bfloat16          # packed apply on bf16 VALU

    row_bytes = HW * itemsize
    # Per-row working set: double-buffered in+out dtype rows + ~3 f32 temporaries.
    per_row_ws = 4 * row_bytes + 3 * HW * 4 + 64

    if (block_rows is None and HW > LANE
            and per_row_ws * min(sub, BC) > vmem_budget_bytes):
        # Even the minimum row group does not fit at full HW: split the plane.
        out2 = _adain_hw_split(x2, w2, b2, eps, sub, itemsize,
                               vmem_budget_bytes, lowp_apply)
        return out2.reshape(B, C, H, W)

    if block_rows is not None:
        tbc = int(block_rows)
    else:
        tbc_cap = max(sub, (vmem_budget_bytes // per_row_ws) // sub * sub)
        total_in = BC * row_bytes
        if total_in >= (16 << 20):
            want_steps = 8            # >= 4 steps per TensorCore on v7x
        elif total_in >= (3 << 20):
            want_steps = 4
        elif total_in >= (1 << 20):
            want_steps = 2
        else:
            want_steps = 1
        tbc = _round_up(_cdiv(BC, want_steps), sub)
        # Keep each step's input DMA on the >= ~512 KiB efficiency plateau.
        min_tbc = _round_up(_cdiv(512 << 10, max(row_bytes, 1)), sub)
        tbc = max(tbc, min(min_tbc, _round_up(BC, sub)), sub)
        tbc = min(tbc, tbc_cap)
    if tbc >= BC:
        tbc = BC                      # single full block along the instance dim
    grid_n = _cdiv(BC, tbc)

    out2 = pl.pallas_call(
        functools.partial(_adain_kernel, eps=eps, lowp_apply=lowp_apply),
        out_shape=jax.ShapeDtypeStruct((BC, HW), x.dtype),
        grid=(grid_n,),
        in_specs=[
            pl.BlockSpec((tbc, HW), lambda i: (i, 0)),   # x rows (full plane per row)
            pl.BlockSpec((tbc, 1), lambda i: (i, 0)),    # gamma
            pl.BlockSpec((tbc, 1), lambda i: (i, 0)),    # beta
        ],
        out_specs=pl.BlockSpec((tbc, HW), lambda i: (i, 0)),
        compiler_params=pltpu.CompilerParams(
            dimension_semantics=("parallel",),
            vmem_limit_bytes=_vmem_limit(tbc * per_row_ws),
        ),
    )(x2, w2, b2)

    return out2.reshape(B, C, H, W)


def _reference(x, weight, bias, eps=EPS):
    # Pure-JAX reference of the PyTorch forward for verification.
    B, C, H, W = x.shape
    xf = x.reshape(B * C, H * W).astype(jnp.float32)
    mean = xf.mean(axis=1, keepdims=True)
    var = ((xf - mean) ** 2).mean(axis=1, keepdims=True)
    out = (xf - mean) / jnp.sqrt(var + eps)
    out = out * weight.astype(jnp.float32)[:, None] + bias.astype(jnp.float32)[:, None]
    return out.reshape(B, C, H, W).astype(x.dtype)


if __name__ == "__main__":
    key = jax.random.PRNGKey(0)
    k1, k2, k3, k4, kw, kb = jax.random.split(key, 6)

    # 1) Main case: B=2, C=4, H=W=16 (HW = 256, lane-aligned).
    B, C, H, W = 2, 4, 16, 16
    x = jax.random.normal(k1, (B, C, H, W), dtype=jnp.float32)
    weight = jax.random.normal(kw, (B * C,), dtype=jnp.float32) * 0.5 + 1.0
    bias = jax.random.normal(kb, (B * C,), dtype=jnp.float32) * 0.1
    out = jax.block_until_ready(adaptive_instance_norm_2d(x, weight, bias))
    ref = _reference(x, weight, bias)
    assert out.shape == x.shape
    assert jnp.allclose(out, ref, atol=1e-5, rtol=1e-5), "mismatch (main)"

    # 2) Ragged lanes: HW = 100 (not a multiple of 128), BC = 5 (full-dim block).
    x2 = jax.random.normal(k2, (1, 5, 10, 10), dtype=jnp.float32)
    w2 = jnp.linspace(0.5, 1.5, 5, dtype=jnp.float32)
    b2 = jnp.linspace(-0.2, 0.2, 5, dtype=jnp.float32)
    out2 = jax.block_until_ready(adaptive_instance_norm_2d(x2, w2, b2))
    assert jnp.allclose(out2, _reference(x2, w2, b2), atol=1e-5, rtol=1e-5), \
        "mismatch (ragged lanes)"

    # 3) Partial final instance block: BC = 20 with forced 8-row blocks (grid of 3,
    #    last block half OOB) and HW = 144 — checks tail-row garbage never leaks.
    x3 = jax.random.normal(k3, (2, 10, 12, 12), dtype=jnp.float32) * 2.0 + 1.0
    w3 = jnp.linspace(0.8, 1.2, 20, dtype=jnp.float32)
    b3 = jnp.linspace(-0.3, 0.3, 20, dtype=jnp.float32)
    out3 = jax.block_until_ready(adaptive_instance_norm_2d(x3, w3, b3, block_rows=8))
    assert jnp.allclose(out3, _reference(x3, w3, b3), atol=1e-5, rtol=1e-5), \
        "mismatch (partial instance block)"

    # 4) Large-plane HW-split fallback, forced via a tiny VMEM budget (BC=8, HW=900).
    x4 = jax.random.normal(k4, (1, 8, 30, 30), dtype=jnp.float32)
    w4 = jnp.linspace(0.9, 1.1, 8, dtype=jnp.float32)
    b4 = jnp.linspace(-0.1, 0.1, 8, dtype=jnp.float32)
    out4 = jax.block_until_ready(
        adaptive_instance_norm_2d(x4, w4, b4, vmem_budget_bytes=96 << 10))
    assert jnp.allclose(out4, _reference(x4, w4, b4), atol=1e-4, rtol=1e-4), \
        "mismatch (hw-split fallback)"

    print("KERNEL_OK")
</pallas_src>

<mosaic_0001>
module attributes {stable_mosaic.version = 11 : i64} {
  func.func @_adain_kernel(%arg0: i32, %arg1: memref<8x256xf32, #tpu.memory_space<vmem>>, %arg2: memref<8x1xf32, #tpu.memory_space<vmem>>, %arg3: memref<8x1xf32, #tpu.memory_space<vmem>>, %arg4: memref<8x256xf32, #tpu.memory_space<vmem>>) attributes {dimension_semantics = [#tpu.dimension_semantics<parallel>], iteration_bounds = array<i64: 1>, scalar_prefetch = 0 : i64, scratch_operands = 0 : i64, tpu.core_type = #tpu.core_type<tc>, window_params = [{transform_indices = @transform_0, window_bounds = array<i64: 8, 256>}, {transform_indices = @transform_1, window_bounds = array<i64: 8, 1>}, {transform_indices = @transform_2, window_bounds = array<i64: 8, 1>}, {transform_indices = @transform_3, window_bounds = array<i64: 8, 256>}]} {
    %c0 = arith.constant 0 : index
    %c0_0 = arith.constant 0 : index
    %0 = vector.load %arg1[%c0, %c0_0] : memref<8x256xf32, #tpu.memory_space<vmem>>, vector<8x256xf32>
    %cst = arith.constant dense<0.000000e+00> : vector<8xf32>
    %1 = vector.multi_reduction <add>, %0, %cst [1] : vector<8x256xf32> to vector<8xf32>
    %2 = vector.shape_cast %1 : vector<8xf32> to vector<8x1xf32>
    %cst_1 = arith.constant 2.560000e+02 : f32
    %3 = vector.broadcast %cst_1 : f32 to vector<8x1xf32>
    %4 = arith.divf %2, %3 : vector<8x1xf32>
    %5 = vector.broadcast %4 : vector<8x1xf32> to vector<8x256xf32>
    %6 = arith.subf %0, %5 : vector<8x256xf32>
    %7 = arith.mulf %6, %6 : vector<8x256xf32>
    %cst_2 = arith.constant dense<0.000000e+00> : vector<8xf32>
    %8 = vector.multi_reduction <add>, %7, %cst_2 [1] : vector<8x256xf32> to vector<8xf32>
    %9 = vector.shape_cast %8 : vector<8xf32> to vector<8x1xf32>
    %cst_3 = arith.constant 2.560000e+02 : f32
    %10 = vector.broadcast %cst_3 : f32 to vector<8x1xf32>
    %11 = arith.divf %9, %10 : vector<8x1xf32>
    %c0_4 = arith.constant 0 : index
    %c0_5 = arith.constant 0 : index
    %12 = vector.load %arg2[%c0_4, %c0_5] : memref<8x1xf32, #tpu.memory_space<vmem>>, vector<8x1xf32>
    %cst_6 = arith.constant 9.99999974E-6 : f32
    %13 = vector.broadcast %cst_6 : f32 to vector<8x1xf32>
    %14 = arith.addf %11, %13 : vector<8x1xf32>
    %15 = math.rsqrt %14 : vector<8x1xf32>
    %16 = arith.mulf %12, %15 : vector<8x1xf32>
    %17 = vector.broadcast %16 : vector<8x1xf32> to vector<8x256xf32>
    %18 = arith.mulf %6, %17 : vector<8x256xf32>
    %c0_7 = arith.constant 0 : index
    %c0_8 = arith.constant 0 : index
    %19 = vector.load %arg3[%c0_7, %c0_8] : memref<8x1xf32, #tpu.memory_space<vmem>>, vector<8x1xf32>
    %20 = vector.broadcast %19 : vector<8x1xf32> to vector<8x256xf32>
    %21 = arith.addf %18, %20 : vector<8x256xf32>
    %c0_9 = arith.constant 0 : index
    %c0_10 = arith.constant 0 : index
    %22 = vector.load %arg4[%c0_9, %c0_10] : memref<8x256xf32, #tpu.memory_space<vmem>>, vector<8x256xf32>
    tpu.vector_store %arg4[%c0_9, %c0_10], %21 {strides = array<i32>} : memref<8x256xf32, #tpu.memory_space<vmem>>, vector<8x256xf32>,
    return
  }
  func.func @transform_0(%arg0: i32) -> (i32, i32) {
    %c0_i32 = arith.constant 0 : i32
    %c0_i32_0 = arith.constant 0 : i32
    return %arg0, %c0_i32 : i32, i32
  }
  func.func @transform_1(%arg0: i32) -> (i32, i32) {
    %c0_i32 = arith.constant 0 : i32
    %c0_i32_0 = arith.constant 0 : i32
    return %arg0, %c0_i32 : i32, i32
  }
  func.func @transform_2(%arg0: i32) -> (i32, i32) {
    %c0_i32 = arith.constant 0 : i32
    %c0_i32_0 = arith.constant 0 : i32
    return %arg0, %c0_i32 : i32, i32
  }
  func.func @transform_3(%arg0: i32) -> (i32, i32) {
    %c0_i32 = arith.constant 0 : i32
    %c0_i32_0 = arith.constant 0 : i32
    return %arg0, %c0_i32 : i32, i32
  }
}

</mosaic_0001>

<llo_original>
// kernel: tpu_custom_call.1
$region0: #{tpu_custom_call.1}
  #allocation0 [shape = 'u32[]', space=smem, size = 0x4, offset = 0x4, fixed_abs, tag = 'smem constant byte address 0x4 - core index']
  #allocation1 [shape = 'u32[144,128]{1,0:T(1,128)}', space=vmem, size = 0x12000, scoped, tag = 'internal scratch']
  %s0 = inlined_call_operand.vmem [shape: f32[8,256], index: 0, kind: input, shape index: {}]
  %s1 = inlined_call_operand.vmem [shape: f32[8,1], index: 1, kind: input, shape index: {}]
  %s2 = inlined_call_operand.vmem [shape: f32[8,1], index: 2, kind: input, shape index: {}]
  %s3 = inlined_call_operand.hbm [shape: f32[8,256], index: 3, kind: output, shape index: {}]
  %s4 = sld [smem:[#allocation0]]
  $region22: #{tpu_custom_call.1} parent=0
    _
  %s6 = ssub.s32 1, %s4
  %s7 = scalar_select 0, %s6, %s4
  $region1: #{tpu_custom_call.1} parent=0
    #allocation2 [shape = 'u8[8192]{0}', space=vmem, size = 0x2000, scoped, tag = 'output window, operand 0, single buffered']
    #allocation3 [shape = 's32[1]{0}', space=sflag, size = 0x4, scoped, tag = 'scoped memory for tpu_custom_call.1']
    %8 = vsyncpa [#allocation3], 0
    // Predicated region
    $region2: #{tpu_custom_call.1} parent=1 // pred_check
      _
    $region3: #{tpu_custom_call.1} parent=1 // pred_check_branch
      %10 = sbr.rel (0) target = $region5
    $region4: #{tpu_custom_call.1} parent=1 // pred_region
      _
    $region5: #{tpu_custom_call.1} parent=1 // pred_fallthru
      _
    // Predicated region
    $region6: #{tpu_custom_call.1} parent=1 // pred_check
      _
    $region7: #{tpu_custom_call.1} parent=1 // pred_check_branch
      %12 = sbr.rel (0) target = $region9
    $region8: #{tpu_custom_call.1} parent=1 // pred_region
      _
    $region9: #{tpu_custom_call.1} parent=1 // pred_fallthru
      _
    // Predicated region
    $region10: #{tpu_custom_call.1} parent=1 // pred_check
      _
    $region11: #{tpu_custom_call.1} parent=1 // pred_check_branch
      %14 = sbr.rel (0) target = $region13
    $region12: #{tpu_custom_call.1} parent=1 // pred_region
      _
    $region13: #{tpu_custom_call.1} parent=1 // pred_fallthru
      _
    %v15 = vld [vmem:[%s0] sm:$0xff]
    %v16 = vld [vmem:[%s0 + $0x8] sm:$0xff]
    %v17 = vadd.f32 %v15, %v16
    %18 = vadd.xlane.f32.xlu0 %v17
    %v19 = vpop.xlane.xlu0 %18
    %v20 = vrcp.pop 256.0
    %v21 = vmul.f32 %v19, %v20
    %v22 = vsub.f32 %v15, %v21
    %v23 = vsub.f32 %v16, %v21
    %v24 = vmul.f32 %v22, %v22
    %v25 = vmul.f32 %v23, %v23
    %v26 = vadd.f32 %v24, %v25
    %27 = vadd.xlane.f32.xlu0 %v26
    %v28 = vpop.xlane.xlu0 %27
    %v29 = vmul.f32 %v28, %v20
    %v30 = vld [vmem:[%s1] sm:$0xff]
    %v31 = vadd.f32 %v29, 1e-05
    %v32 = vrsqrt.pop %v31
    %v33 = vmul.f32 %v30, %v32
    %35 = vset.pattern.permute.xlu0 0
    %36 = vperm.xlu0 %35, %v33
    %v37 = vpop.permute.xlu0 %36
    %v39 = vmul.f32 %v22, %v37
    %v40 = vmul.f32 %v23, %v37
    %v41 = vld [vmem:[%s2] sm:$0xff]
    %43 = vset.pattern.permute.xlu0 0
    %44 = vperm.xlu0 %43, %v41
    %v45 = vpop.permute.xlu0 %44
    %v47 = vadd.f32 %v39, %v45
    %v48 = vadd.f32 %v40, %v45
    %49 = vst [vmem:[#allocation2] sm:$0xff] %v47
    %50 = vst [vmem:[#allocation2 + $0x8] sm:$0xff] %v48
    // Predicated region
    $region14: #{tpu_custom_call.1} parent=1 // pred_check
      _
    $region15: #{tpu_custom_call.1} parent=1 // pred_check_branch
      %52 = sbr.rel (0) target = $region17
    $region16: #{tpu_custom_call.1} parent=1 // pred_region
      %s54 = ssub.s32 256, 256
      %55 = vsyncadd [#allocation3], %s54
      %s57 = sshll.u32 [#allocation2], 4
      %s58 = int_to_ptr.vmem [resolvable:$true] %s57
      %60 = dma.vmem_to_hbm [thread:$0]  %s58, 256, %s3, [#allocation3]
    $region17: #{tpu_custom_call.1} parent=1 // pred_fallthru
      _
    // Predicated region
    $region18: #{tpu_custom_call.1} parent=1 // pred_check
      _
    $region19: #{tpu_custom_call.1} parent=1 // pred_check_branch
      %62 = sbr.rel (0) target = $region21
    $region20: #{tpu_custom_call.1} parent=1 // pred_region
      %63 = dma.done [#allocation3], 256
    $region21: #{tpu_custom_call.1} parent=1 // pred_fallthru
      _
    %64 = vsyncpa [#allocation3], 1

</llo_original>
